<compile_context>
chip_gen: v5e
topology: v5e:2x2
jax: 0.10.0
libtpu: 0.0.40
codegen_flags: <defaults>
</compile_context>

<pallas_src>
import functools

import jax
import jax.numpy as jnp
from jax.experimental import pallas as pl
from jax.experimental.pallas import tpu as pltpu


def _encoder_kernel(x_ref, w1_ref, b1_ref, w2_ref, b2_ref, o_ref, *, tb, n_pos):
    # x_ref: (tb * n_pos, k_pad) bf16 -- zero-padded patch rows for `tb` images.
    x = x_ref[...]                                             # bf16 straight to the MXU

    # Patch-conv stem as a GEMM: bf16 x bf16 -> f32 accumulator (lane-dense K).
    h = jnp.dot(x, w1_ref[...], preferred_element_type=jnp.float32)
    h = h + b1_ref[...].astype(jnp.float32)
    h = jax.nn.gelu(h, approximate=True)                       # tanh form -> EUP slot

    # Pointwise (1x1) conv as a GEMM; feed bf16 back to the MXU.
    y = jnp.dot(h.astype(w2_ref.dtype), w2_ref[...],
                preferred_element_type=jnp.float32)
    y = y + b2_ref[...].astype(jnp.float32)
    y = jax.nn.gelu(y, approximate=True)

    # Global average pool: one fused sublane reduction over n_pos per image and a single
    # unmasked (tb, D) store.  The reshape is layout-free (contiguous rows, n_pos % 8 == 0).
    d_feat = y.shape[-1]
    pooled = y.reshape(tb, n_pos, d_feat).sum(axis=1) * (1.0 / n_pos)
    o_ref[...] = pooled.astype(o_ref.dtype)


def _pick_batch_tile(B, n_pos, k_pad, c_stem, d_feat, *, vmem_budget=40 * 1024 * 1024):
    """VMEM-aware batch-tile choice; guarantees >=2 grid steps once B >= 16 (v7x megacore)."""

    def footprint(tb):
        x_bytes = 2 * tb * n_pos * k_pad * 2                      # double-buffered bf16 input
        act_bytes = tb * n_pos * (c_stem * 4 + c_stem * 2 + d_feat * 4)  # h f32, h bf16, y f32
        out_bytes = 2 * tb * d_feat * 4                            # double-buffered f32 output
        w_bytes = (k_pad * c_stem + c_stem * d_feat + c_stem + d_feat) * 2
        return x_bytes + act_bytes + out_bytes + w_bytes

    if B <= 8:
        tb = B                                                     # tiny batch: one step
    else:
        tb = max(8, (min(B, 64) // 8) * 8)
        if B >= 16:
            # keep at least 2 grid steps so dimension_semantics=("parallel",) can use both
            # v7x TensorCores (no effect on v5e/v6e).
            tb = min(tb, max(8, ((B // 2) // 8) * 8))
    while tb > 8 and footprint(tb) > vmem_budget:
        tb -= 8
    return tb


def image_encoder(x, w_stem, b_stem, w_point, b_point, *, patch=4):
    """Forward pass: images (B, C, H, W) -> pooled features (B, D_FEAT)."""
    B, C, H, W = x.shape
    P = patch
    assert H % P == 0 and W % P == 0
    nh, nw = H // P, W // P
    n_pos = nh * nw
    k_patch = C * P * P
    assert n_pos % 8 == 0, "spatial positions per image must be sublane-aligned"

    # im2col for the non-overlapping patch conv (pure layout plumbing, done in the wrapper).
    patches = x.reshape(B, C, nh, P, nw, P).transpose(0, 2, 4, 1, 3, 5)
    patches = patches.reshape(B * n_pos, k_patch).astype(jnp.bfloat16)

    # Zero-pad the contraction dim to a lane-dense multiple of 128 (numerically exact:
    # padded columns of x meet padded zero rows of w_stem).
    k_pad = max(128, ((k_patch + 127) // 128) * 128)
    if k_pad != k_patch:
        patches = jnp.pad(patches, ((0, 0), (0, k_pad - k_patch)))
        w_stem = jnp.pad(w_stem, ((0, k_pad - k_patch), (0, 0)))

    c_stem = w_stem.shape[1]
    d_feat = w_point.shape[1]

    tb = _pick_batch_tile(B, n_pos, k_pad, c_stem, d_feat)
    grid = (pl.cdiv(B, tb),)

    kernel = functools.partial(_encoder_kernel, tb=tb, n_pos=n_pos)

    return pl.pallas_call(
        kernel,
        out_shape=jax.ShapeDtypeStruct((B, d_feat), jnp.float32),
        grid=grid,
        in_specs=[
            # batch tile of (zero-padded) patch rows, pipelined over the grid
            pl.BlockSpec((tb * n_pos, k_pad), lambda i: (i, 0)),
            # weights / biases: constant index_map -> VMEM-resident, no re-DMA per step
            pl.BlockSpec((k_pad, c_stem), lambda i: (0, 0)),
            pl.BlockSpec((1, c_stem), lambda i: (0, 0)),
            pl.BlockSpec((c_stem, d_feat), lambda i: (0, 0)),
            pl.BlockSpec((1, d_feat), lambda i: (0, 0)),
        ],
        out_specs=pl.BlockSpec((tb, d_feat), lambda i: (i, 0)),
        compiler_params=pltpu.CompilerParams(
            # batch grid is embarrassingly parallel -> shard across TensorCores (v7x megacore)
            dimension_semantics=("parallel",),
            # safe on every generation (v7x has only 64 MiB VMEM per TC); tb is budgeted
            # against ~40 MiB so this limit is never the binding constraint.
            vmem_limit_bytes=48 * 1024 * 1024,
        ),
    )(patches, w_stem, b_stem, w_point, b_point)


def init_params(key, c_in, patch, c_stem, d_feat):
    """nn.Conv2d/nn.Linear-style uniform init; weights stored bf16 for the MXU."""
    k1, k2, k3, k4 = jax.random.split(key, 4)
    k_patch = c_in * patch * patch
    lim1 = 1.0 / (k_patch ** 0.5)
    lim2 = 1.0 / (c_stem ** 0.5)
    w_stem = jax.random.uniform(k1, (k_patch, c_stem), jnp.float32, -lim1, lim1).astype(jnp.bfloat16)
    b_stem = jax.random.uniform(k2, (1, c_stem), jnp.float32, -lim1, lim1).astype(jnp.bfloat16)
    w_point = jax.random.uniform(k3, (c_stem, d_feat), jnp.float32, -lim2, lim2).astype(jnp.bfloat16)
    b_point = jax.random.uniform(k4, (1, d_feat), jnp.float32, -lim2, lim2).astype(jnp.bfloat16)
    return w_stem, b_stem, w_point, b_point


if __name__ == "__main__":
    B, C, H, W = 2, 3, 16, 16
    PATCH = 4
    C_STEM = 128       # lane-dense hidden width
    D_FEAT = 256       # lane-dense encoder feature dim

    key = jax.random.PRNGKey(0)
    kx, kp = jax.random.split(key)
    x = jax.random.normal(kx, (B, C, H, W), jnp.float32)
    w_stem, b_stem, w_point, b_point = init_params(kp, C, PATCH, C_STEM, D_FEAT)

    feats = image_encoder(x, w_stem, b_stem, w_point, b_point, patch=PATCH)
    feats = jax.block_until_ready(feats)

    # Pure-JAX reference with the same bf16 operand rounding as the kernel.
    k_patch = C * PATCH * PATCH
    nh, nw = H // PATCH, W // PATCH
    patches = x.reshape(B, C, nh, PATCH, nw, PATCH).transpose(0, 2, 4, 1, 3, 5)
    patches = patches.reshape(B, nh * nw, k_patch).astype(jnp.bfloat16).astype(jnp.float32)
    h = jnp.einsum("bnk,kc->bnc", patches, w_stem.astype(jnp.float32),
                   precision=jax.lax.Precision.HIGHEST) + b_stem.astype(jnp.float32)
    h = jax.nn.gelu(h, approximate=True)
    h = h.astype(jnp.bfloat16).astype(jnp.float32)
    y = jnp.einsum("bnc,cd->bnd", h, w_point.astype(jnp.float32),
                   precision=jax.lax.Precision.HIGHEST) + b_point.astype(jnp.float32)
    y = jax.nn.gelu(y, approximate=True)
    ref = y.mean(axis=1)

    assert feats.shape == (B, D_FEAT)
    assert jnp.allclose(feats, ref, atol=2e-3, rtol=2e-3), float(jnp.max(jnp.abs(feats - ref)))

    print("KERNEL_OK")
</pallas_src>

<mosaic_0001>
module attributes {stable_mosaic.version = 11 : i64} {
  func.func @_encoder_kernel(%arg0: i32, %arg1: memref<32x128xbf16, #tpu.memory_space<vmem>>, %arg2: memref<128x128xbf16, #tpu.memory_space<vmem>>, %arg3: memref<1x128xbf16, #tpu.memory_space<vmem>>, %arg4: memref<128x256xbf16, #tpu.memory_space<vmem>>, %arg5: memref<1x256xbf16, #tpu.memory_space<vmem>>, %arg6: memref<2x256xf32, #tpu.memory_space<vmem>>) attributes {dimension_semantics = [#tpu.dimension_semantics<parallel>], iteration_bounds = array<i64: 1>, scalar_prefetch = 0 : i64, scratch_operands = 0 : i64, tpu.core_type = #tpu.core_type<tc>, window_params = [{transform_indices = @transform_0, window_bounds = array<i64: 32, 128>}, {pipeline_mode = #tpu.pipeline_mode<synchronous>, transform_indices = @transform_1, window_bounds = array<i64: 128, 128>}, {pipeline_mode = #tpu.pipeline_mode<synchronous>, transform_indices = @transform_2, window_bounds = array<i64: 1, 128>}, {pipeline_mode = #tpu.pipeline_mode<synchronous>, transform_indices = @transform_3, window_bounds = array<i64: 128, 256>}, {pipeline_mode = #tpu.pipeline_mode<synchronous>, transform_indices = @transform_4, window_bounds = array<i64: 1, 256>}, {transform_indices = @transform_5, window_bounds = array<i64: 2, 256>}]} {
    %c0 = arith.constant 0 : index
    %c0_0 = arith.constant 0 : index
    %0 = vector.load %arg1[%c0, %c0_0] : memref<32x128xbf16, #tpu.memory_space<vmem>>, vector<32x128xbf16>
    %c0_1 = arith.constant 0 : index
    %c0_2 = arith.constant 0 : index
    %1 = vector.load %arg2[%c0_1, %c0_2] : memref<128x128xbf16, #tpu.memory_space<vmem>>, vector<128x128xbf16>
    %cst = arith.constant dense<0.000000e+00> : vector<32x128xf32>
    %2 = tpu.matmul %0, %1, %cst {dimension_numbers = #tpu.dot_dimension_numbers<[1], [0], [0], [1], [0, 0, 1, 1], [], []>} : vector<32x128xbf16>, vector<128x128xbf16>, vector<32x128xf32> -> vector<32x128xf32>
    %c0_3 = arith.constant 0 : index
    %c0_4 = arith.constant 0 : index
    %3 = vector.load %arg3[%c0_3, %c0_4] : memref<1x128xbf16, #tpu.memory_space<vmem>>, vector<1x128xbf16>
    %4 = arith.extf %3 : vector<1x128xbf16> to vector<1x128xf32>
    %5 = vector.broadcast %4 : vector<1x128xf32> to vector<32x128xf32>
    %6 = arith.addf %2, %5 : vector<32x128xf32>
    %7 = arith.mulf %6, %6 : vector<32x128xf32>
    %8 = arith.mulf %6, %7 : vector<32x128xf32>
    %cst_5 = arith.constant 4.471500e-02 : f32
    %9 = vector.broadcast %cst_5 : f32 to vector<32x128xf32>
    %10 = arith.mulf %9, %8 : vector<32x128xf32>
    %11 = arith.addf %6, %10 : vector<32x128xf32>
    %cst_6 = arith.constant 0.797884583 : f32
    %12 = vector.broadcast %cst_6 : f32 to vector<32x128xf32>
    %13 = arith.mulf %12, %11 : vector<32x128xf32>
    %14 = math.tanh %13 : vector<32x128xf32>
    %cst_7 = arith.constant 1.000000e+00 : f32
    %15 = vector.broadcast %cst_7 : f32 to vector<32x128xf32>
    %16 = arith.addf %15, %14 : vector<32x128xf32>
    %cst_8 = arith.constant 5.000000e-01 : f32
    %17 = vector.broadcast %cst_8 : f32 to vector<32x128xf32>
    %18 = arith.mulf %17, %16 : vector<32x128xf32>
    %19 = arith.mulf %6, %18 : vector<32x128xf32>
    %20 = arith.truncf %19 : vector<32x128xf32> to vector<32x128xbf16>
    %c0_9 = arith.constant 0 : index
    %c0_10 = arith.constant 0 : index
    %21 = vector.load %arg4[%c0_9, %c0_10] : memref<128x256xbf16, #tpu.memory_space<vmem>>, vector<128x256xbf16>
    %cst_11 = arith.constant dense<0.000000e+00> : vector<32x256xf32>
    %22 = tpu.matmul %20, %21, %cst_11 {dimension_numbers = #tpu.dot_dimension_numbers<[1], [0], [0], [1], [0, 0, 1, 1], [], []>} : vector<32x128xbf16>, vector<128x256xbf16>, vector<32x256xf32> -> vector<32x256xf32>
    %c0_12 = arith.constant 0 : index
    %c0_13 = arith.constant 0 : index
    %23 = vector.load %arg5[%c0_12, %c0_13] : memref<1x256xbf16, #tpu.memory_space<vmem>>, vector<1x256xbf16>
    %24 = arith.extf %23 : vector<1x256xbf16> to vector<1x256xf32>
    %25 = vector.broadcast %24 : vector<1x256xf32> to vector<32x256xf32>
    %26 = arith.addf %22, %25 : vector<32x256xf32>
    %27 = arith.mulf %26, %26 : vector<32x256xf32>
    %28 = arith.mulf %26, %27 : vector<32x256xf32>
    %cst_14 = arith.constant 4.471500e-02 : f32
    %29 = vector.broadcast %cst_14 : f32 to vector<32x256xf32>
    %30 = arith.mulf %29, %28 : vector<32x256xf32>
    %31 = arith.addf %26, %30 : vector<32x256xf32>
    %cst_15 = arith.constant 0.797884583 : f32
    %32 = vector.broadcast %cst_15 : f32 to vector<32x256xf32>
    %33 = arith.mulf %32, %31 : vector<32x256xf32>
    %34 = math.tanh %33 : vector<32x256xf32>
    %cst_16 = arith.constant 1.000000e+00 : f32
    %35 = vector.broadcast %cst_16 : f32 to vector<32x256xf32>
    %36 = arith.addf %35, %34 : vector<32x256xf32>
    %cst_17 = arith.constant 5.000000e-01 : f32
    %37 = vector.broadcast %cst_17 : f32 to vector<32x256xf32>
    %38 = arith.mulf %37, %36 : vector<32x256xf32>
    %39 = arith.mulf %26, %38 : vector<32x256xf32>
    %40 = vector.shape_cast %39 : vector<32x256xf32> to vector<2x16x256xf32>
    %cst_18 = arith.constant dense<0.000000e+00> : vector<2x256xf32>
    %41 = vector.multi_reduction <add>, %40, %cst_18 [1] : vector<2x16x256xf32> to vector<2x256xf32>
    %cst_19 = arith.constant 6.250000e-02 : f32
    %42 = vector.broadcast %cst_19 : f32 to vector<2x256xf32>
    %43 = arith.mulf %41, %42 : vector<2x256xf32>
    %c0_20 = arith.constant 0 : index
    %c0_21 = arith.constant 0 : index
    %44 = vector.load %arg6[%c0_20, %c0_21] : memref<2x256xf32, #tpu.memory_space<vmem>>, vector<2x256xf32>
    tpu.vector_store %arg6[%c0_20, %c0_21], %43 {strides = array<i32>} : memref<2x256xf32, #tpu.memory_space<vmem>>, vector<2x256xf32>,
    return
  }
  func.func @transform_0(%arg0: i32) -> (i32, i32) {
    %c0_i32 = arith.constant 0 : i32
    %c0_i32_0 = arith.constant 0 : i32
    return %arg0, %c0_i32 : i32, i32
  }
  func.func @transform_1(%arg0: i32) -> (i32, i32) {
    %c0_i32 = arith.constant 0 : i32
    %c0_i32_0 = arith.constant 0 : i32
    %c0_i32_1 = arith.constant 0 : i32
    return %c0_i32, %c0_i32_0 : i32, i32
  }
  func.func @transform_2(%arg0: i32) -> (i32, i32) {
    %c0_i32 = arith.constant 0 : i32
    %c0_i32_0 = arith.constant 0 : i32
    %c0_i32_1 = arith.constant 0 : i32
    return %c0_i32, %c0_i32_0 : i32, i32
  }
  func.func @transform_3(%arg0: i32) -> (i32, i32) {
    %c0_i32 = arith.constant 0 : i32
    %c0_i32_0 = arith.constant 0 : i32
    %c0_i32_1 = arith.constant 0 : i32
    return %c0_i32, %c0_i32_0 : i32, i32
  }
  func.func @transform_4(%arg0: i32) -> (i32, i32) {
    %c0_i32 = arith.constant 0 : i32
    %c0_i32_0 = arith.constant 0 : i32
    %c0_i32_1 = arith.constant 0 : i32
    return %c0_i32, %c0_i32_0 : i32, i32
  }
  func.func @transform_5(%arg0: i32) -> (i32, i32) {
    %c0_i32 = arith.constant 0 : i32
    %c0_i32_0 = arith.constant 0 : i32
    return %arg0, %c0_i32 : i32, i32
  }
}

</mosaic_0001>

<llo_original>
// kernel: tpu_custom_call.1
$region0: #{tpu_custom_call.1}
  #allocation0 [shape = 'u32[]', space=smem, size = 0x4, offset = 0x4, fixed_abs, tag = 'smem constant byte address 0x4 - core index']
  #allocation1 [shape = 'u32[72,128]{1,0:T(1,128)}', space=vmem, size = 0x9000, scoped, tag = 'internal scratch']
  %s0 = inlined_call_operand.hbm [shape: bf16[32,128], index: 0, kind: input, shape index: {}]
  %s1 = inlined_call_operand.hbm [shape: bf16[128,128], index: 1, kind: input, shape index: {}]
  %s2 = inlined_call_operand.vmem [shape: bf16[1,128], index: 2, kind: input, shape index: {}]
  %s3 = inlined_call_operand.hbm [shape: bf16[128,256], index: 3, kind: input, shape index: {}]
  %s4 = inlined_call_operand.vmem [shape: bf16[1,256], index: 4, kind: input, shape index: {}]
  %s5 = inlined_call_operand.hbm [shape: f32[2,256], index: 5, kind: output, shape index: {}]
  %s6 = sld [smem:[#allocation0]]
  $region42: #{tpu_custom_call.1} parent=0
    _
  %s8 = ssub.s32 1, %s6
  %s9 = scalar_select 0, %s8, %s6
  $region1: #{tpu_custom_call.1} parent=0
    #allocation2 [shape = 'u8[8192]{0}', space=vmem, size = 0x2000, scoped, tag = 'input window, operand 0, single buffered']
    #allocation3 [shape = 's32[1]{0}', space=sflag, size = 0x4, scoped, tag = 'scoped memory for tpu_custom_call.1']
    #allocation4 [shape = 's32[1]{0}', space=sflag, size = 0x4, scoped, tag = 'scoped memory for tpu_custom_call.1']
    #allocation5 [shape = 'u8[32768]{0}', space=vmem, size = 0x8000, scoped, tag = 'input window, operand 1, single buffered']
    #allocation6 [shape = 's32[1]{0}', space=sflag, size = 0x4, scoped, tag = 'scoped memory for tpu_custom_call.1']
    #allocation7 [shape = 'u8[65536]{0}', space=vmem, size = 0x10000, scoped, tag = 'input window, operand 3, single buffered']
    #allocation8 [shape = 'u8[2048]{0}', space=vmem, size = 0x800, scoped, tag = 'output window, operand 0, single buffered']
    %10 = vsyncpa [#allocation3], 0
    %11 = vsyncpa [#allocation6], 0
    %12 = vsyncpa [#allocation4], 0
    // Predicated region
    $region2: #{tpu_custom_call.1} parent=1 // pred_check
      _
    $region3: #{tpu_custom_call.1} parent=1 // pred_check_branch
      %14 = sbr.rel (0) target = $region5
    $region4: #{tpu_custom_call.1} parent=1 // pred_region
      %16 = vsyncadd [#allocation3], 0
      %s17 = sshll.u32 %s0, 4
      %s18 = int_to_ptr.hbm [resolvable:$true] %s17
      %s19 = sshll.u32 [#allocation2], 4
      %s20 = int_to_ptr.vmem [resolvable:$true] %s19
      %25 = dma.hbm_to_vmem [thread:$0]  %s18, 256, %s20, [#allocation3], 64, 64, 4
    $region5: #{tpu_custom_call.1} parent=1 // pred_fallthru
      _
    // Predicated region
    $region6: #{tpu_custom_call.1} parent=1 // pred_check
      _
    $region7: #{tpu_custom_call.1} parent=1 // pred_check_branch
      %27 = sbr.rel (0) target = $region9
    $region8: #{tpu_custom_call.1} parent=1 // pred_region
      %29 = vsyncadd [#allocation6], 0
      %s30 = sshll.u32 %s1, 4
      %s31 = int_to_ptr.hbm [resolvable:$true] %s30
      %s32 = sshll.u32 [#allocation5], 4
      %s33 = int_to_ptr.vmem [resolvable:$true] %s32
      %38 = dma.hbm_to_vmem [thread:$0]  %s31, 1024, %s33, [#allocation6], 64, 64, 4
    $region9: #{tpu_custom_call.1} parent=1 // pred_fallthru
      _
    // Predicated region
    $region10: #{tpu_custom_call.1} parent=1 // pred_check
      _
    $region11: #{tpu_custom_call.1} parent=1 // pred_check_branch
      %40 = sbr.rel (0) target = $region13
    $region12: #{tpu_custom_call.1} parent=1 // pred_region
      _
    $region13: #{tpu_custom_call.1} parent=1 // pred_fallthru
      _
    // Predicated region
    $region14: #{tpu_custom_call.1} parent=1 // pred_check
      _
    $region15: #{tpu_custom_call.1} parent=1 // pred_check_branch
      %42 = sbr.rel (0) target = $region17
    $region16: #{tpu_custom_call.1} parent=1 // pred_region
      %44 = vsyncadd [#allocation6], 0
      %s45 = sshll.u32 %s3, 4
      %s46 = int_to_ptr.hbm [resolvable:$true] %s45
      %s47 = sshll.u32 [#allocation7], 4
      %s48 = int_to_ptr.vmem [resolvable:$true] %s47
      %53 = dma.hbm_to_vmem [thread:$0]  %s46, 2048, %s48, [#allocation6], 128, 128, 8
    $region17: #{tpu_custom_call.1} parent=1 // pred_fallthru
      _
    // Predicated region
    $region18: #{tpu_custom_call.1} parent=1 // pred_check
      _
    $region19: #{tpu_custom_call.1} parent=1 // pred_check_branch
      %55 = sbr.rel (0) target = $region21
    $region20: #{tpu_custom_call.1} parent=1 // pred_region
      _
    $region21: #{tpu_custom_call.1} parent=1 // pred_fallthru
      _
    // Predicated region
    $region22: #{tpu_custom_call.1} parent=1 // pred_check
      _
    $region23: #{tpu_custom_call.1} parent=1 // pred_check_branch
      %57 = sbr.rel (0) target = $region25
    $region24: #{tpu_custom_call.1} parent=1 // pred_region
      %59 = dma.done [#allocation3], 256
    $region25: #{tpu_custom_call.1} parent=1 // pred_fallthru
      _
    // Predicated region
    $region26: #{tpu_custom_call.1} parent=1 // pred_check
      _
    $region27: #{tpu_custom_call.1} parent=1 // pred_check_branch
      %61 = sbr.rel (0) target = $region29
    $region28: #{tpu_custom_call.1} parent=1 // pred_region
      %63 = dma.done [#allocation6], 1024
    $region29: #{tpu_custom_call.1} parent=1 // pred_fallthru
      _
    // Predicated region
    $region30: #{tpu_custom_call.1} parent=1 // pred_check
      _
    $region31: #{tpu_custom_call.1} parent=1 // pred_check_branch
      %65 = sbr.rel (0) target = $region33
    $region32: #{tpu_custom_call.1} parent=1 // pred_region
      %67 = dma.done [#allocation6], 2048
    $region33: #{tpu_custom_call.1} parent=1 // pred_fallthru
      _
    %v68 = vld [vmem:[#allocation2] sm:$0xf]
    %v69 = vld [vmem:[#allocation2 + $0x4] sm:$0xf]
    %v70 = vld [vmem:[#allocation2 + $0x8] sm:$0xf]
    %v71 = vld [vmem:[#allocation2 + $0xc] sm:$0xf]
    %v72 = vld [vmem:[#allocation5] sm:$0xf]
    %v73 = vld [vmem:[#allocation5 + $0x4] sm:$0xf]
    %v74 = vld [vmem:[#allocation5 + $0x8] sm:$0xf]
    %v75 = vld [vmem:[#allocation5 + $0xc] sm:$0xf]
    %v76 = vld [vmem:[#allocation5 + $0x10] sm:$0xf]
    %v77 = vld [vmem:[#allocation5 + $0x14] sm:$0xf]
    %v78 = vld [vmem:[#allocation5 + $0x18] sm:$0xf]
    %v79 = vld [vmem:[#allocation5 + $0x1c] sm:$0xf]
    %v80 = vld [vmem:[#allocation5 + $0x20] sm:$0xf]
    %v81 = vld [vmem:[#allocation5 + $0x24] sm:$0xf]
    %v82 = vld [vmem:[#allocation5 + $0x28] sm:$0xf]
    %v83 = vld [vmem:[#allocation5 + $0x2c] sm:$0xf]
    %v84 = vld [vmem:[#allocation5 + $0x30] sm:$0xf]
    %v85 = vld [vmem:[#allocation5 + $0x34] sm:$0xf]
    %v86 = vld [vmem:[#allocation5 + $0x38] sm:$0xf]
    %v87 = vld [vmem:[#allocation5 + $0x3c] sm:$0xf]
    %v88 = vld [vmem:[%s2] sm:$0x1]
    %v89 = vunpack.c.l.bf16 %v88
    %v90 = vperm.slane %v89, 0
    %v95 = vunpack.c.l.b16 %v68
    %v96 = vunpack.c.l.b16 %v69
    %v97 = vunpack.c.l.b16 %v70
    %v98 = vunpack.c.l.b16 %v71
    %v99 = vpack.c.b16 %v96, %v95
    %v100 = vpack.c.b16 %v98, %v97
    %v119 = vunpack.c.l.b16 %v72
    %v120 = vunpack.c.l.b16 %v73
    %v121 = vunpack.c.l.b16 %v74
    %v122 = vunpack.c.l.b16 %v75
    %v123 = vunpack.c.l.b16 %v76
    %v124 = vunpack.c.l.b16 %v77
    %v125 = vunpack.c.l.b16 %v78
    %v126 = vunpack.c.l.b16 %v79
    %v127 = vunpack.c.l.b16 %v80
    %v128 = vunpack.c.l.b16 %v81
    %v129 = vunpack.c.l.b16 %v82
    %v130 = vunpack.c.l.b16 %v83
    %v131 = vunpack.c.l.b16 %v84
    %v132 = vunpack.c.l.b16 %v85
    %v133 = vunpack.c.l.b16 %v86
    %v134 = vunpack.c.l.b16 %v87
    %v135 = vpack.c.b16 %v120, %v119
    %v136 = vpack.c.b16 %v122, %v121
    %v137 = vpack.c.b16 %v124, %v123
    %v138 = vpack.c.b16 %v126, %v125
    %v139 = vpack.c.b16 %v128, %v127
    %v140 = vpack.c.b16 %v130, %v129
    %v141 = vpack.c.b16 %v132, %v131
    %v142 = vpack.c.b16 %v134, %v133
    %151 = vmatpush.bf16.msra.mxu0 %v142
    %152 = vmatpush.bf16.msra.mxu0 %v141
    %153 = vmatpush.bf16.msra.mxu0 %v140
    %154 = vmatpush.bf16.msra.mxu0 %v139
    %155 = vmatpush.bf16.msra.mxu0 %v138
    %156 = vmatpush.bf16.msra.mxu0 %v137
    %157 = vmatpush.bf16.msra.mxu0 %v136
    %158 = vmatpush.bf16.msra.mxu0 %v135
    %159 = vmatmul.bf16.gmra.mxu0 %v99
    %v160 = vpop.f32.mrf.mxu0
    %v161 = vadd.f32 %v90, %v160
    %v162 = vpop.f32.mrf.mxu0
    %v163 = vadd.f32 %v90, %v162
    %164 = vmatmul.bf16.gmra.mxu0 %v100
    %v165 = vpop.f32.mrf.mxu0
    %v166 = vadd.f32 %v90, %v165
    %v167 = vpop.f32.mrf.mxu0
    %v168 = vadd.f32 %v90, %v167
    %169 = vdwg.mxu0
    %v170 = vmul.f32 %v161, %v161
    %v171 = vmul.f32 %v163, %v163
    %v172 = vmul.f32 %v166, %v166
    %v173 = vmul.f32 %v168, %v168
    %v174 = vmul.f32 %v161, %v170
    %v175 = vmul.f32 %v163, %v171
    %v176 = vmul.f32 %v166, %v172
    %v177 = vmul.f32 %v168, %v173
    %v178 = vmul.f32 %v174, 0.044715
    %v179 = vmul.f32 %v175, 0.044715
    %v180 = vmul.f32 %v176, 0.044715
    %v181 = vmul.f32 %v177, 0.044715
    %v182 = vadd.f32 %v161, %v178
    %v183 = vadd.f32 %v163, %v179
    %v184 = vadd.f32 %v166, %v180
    %v185 = vadd.f32 %v168, %v181
    %v186 = vmul.f32 %v182, 0.7978846
    %v187 = vmul.f32 %v183, 0.7978846
    %v188 = vmul.f32 %v184, 0.7978846
    %v189 = vmul.f32 %v185, 0.7978846
    %v190 = vtanh.pop %v186
    %v191 = vtanh.pop %v187
    %v192 = vtanh.pop %v188
    %v193 = vtanh.pop %v189
    %v194 = vadd.f32 %v190, 1.0
    %v195 = vadd.f32 %v191, 1.0
    %v196 = vadd.f32 %v192, 1.0
    %v197 = vadd.f32 %v193, 1.0
    %v198 = vmul.f32 %v194, 0.5
    %v199 = vmul.f32 %v195, 0.5
    %v200 = vmul.f32 %v196, 0.5
    %v201 = vmul.f32 %v197, 0.5
    %v202 = vmul.f32 %v161, %v198
    %v203 = vmul.f32 %v163, %v199
    %v204 = vmul.f32 %v166, %v200
    %v205 = vmul.f32 %v168, %v201
    %v206 = vpack.c.bf16 %v203, %v202
    %v207 = vpack.c.bf16 %v205, %v204
    %v208 = vld [vmem:[#allocation7] sm:$0xff]
    %v209 = vld [vmem:[#allocation7 + $0x8] sm:$0xff]
    %v210 = vld [vmem:[#allocation7 + $0x10] sm:$0xff]
    %v211 = vld [vmem:[#allocation7 + $0x18] sm:$0xff]
    %v212 = vld [vmem:[#allocation7 + $0x20] sm:$0xff]
    %v213 = vld [vmem:[#allocation7 + $0x28] sm:$0xff]
    %v214 = vld [vmem:[#allocation7 + $0x30] sm:$0xff]
    %v215 = vld [vmem:[#allocation7 + $0x38] sm:$0xff]
    %v216 = vld [vmem:[#allocation7 + $0x40] sm:$0xff]
    %v217 = vld [vmem:[#allocation7 + $0x48] sm:$0xff]
    %v218 = vld [vmem:[#allocation7 + $0x50] sm:$0xff]
    %v219 = vld [vmem:[#allocation7 + $0x58] sm:$0xff]
    %v220 = vld [vmem:[#allocation7 + $0x60] sm:$0xff]
    %v221 = vld [vmem:[#allocation7 + $0x68] sm:$0xff]
    %v222 = vld [vmem:[#allocation7 + $0x70] sm:$0xff]
    %v223 = vld [vmem:[#allocation7 + $0x78] sm:$0xff]
    %v224 = vld [vmem:[%s4] sm:$0x3]
    %v225 = vunpack.c.l.bf16 %v224
    %v227 = vperm.slane %v225, 0
    %v228 = vperm.slane %v225, 2
    %v231 = vperm.slane %v227, 0
    %v232 = vperm.slane %v228, 0
    %v249 = vunpack.c.l.b16 %v208
    %v250 = vunpack.c.h.b16 %v208
    %v251 = vunpack.c.l.b16 %v209
    %v252 = vunpack.c.h.b16 %v209
    %v253 = vunpack.c.l.b16 %v210
    %v254 = vunpack.c.h.b16 %v210
    %v255 = vunpack.c.l.b16 %v211
    %v256 = vunpack.c.h.b16 %v211
    %v257 = vunpack.c.l.b16 %v212
    %v258 = vunpack.c.h.b16 %v212
    %v259 = vunpack.c.l.b16 %v213
    %v260 = vunpack.c.h.b16 %v213
    %v261 = vunpack.c.l.b16 %v214
    %v262 = vunpack.c.h.b16 %v214
    %v263 = vunpack.c.l.b16 %v215
    %v264 = vunpack.c.h.b16 %v215
    %v265 = vunpack.c.l.b16 %v216
    %v266 = vunpack.c.h.b16 %v216
    %v267 = vunpack.c.l.b16 %v217
    %v268 = vunpack.c.h.b16 %v217
    %v269 = vunpack.c.l.b16 %v218
    %v270 = vunpack.c.h.b16 %v218
    %v271 = vunpack.c.l.b16 %v219
    %v272 = vunpack.c.h.b16 %v219
    %v273 = vunpack.c.l.b16 %v220
    %v274 = vunpack.c.h.b16 %v220
    %v275 = vunpack.c.l.b16 %v221
    %v276 = vunpack.c.h.b16 %v221
    %v277 = vunpack.c.l.b16 %v222
    %v278 = vunpack.c.h.b16 %v222
    %v279 = vunpack.c.l.b16 %v223
    %v280 = vunpack.c.h.b16 %v223
    %v281 = vpack.c.b16 %v251, %v249
    %v282 = vpack.c.b16 %v252, %v250
    %v283 = vpack.c.b16 %v255, %v253
    %v284 = vpack.c.b16 %v256, %v254
    %v285 = vpack.c.b16 %v259, %v257
    %v286 = vpack.c.b16 %v260, %v258
    %v287 = vpack.c.b16 %v263, %v261
    %v288 = vpack.c.b16 %v264, %v262
    %v289 = vpack.c.b16 %v267, %v265
    %v290 = vpack.c.b16 %v268, %v266
    %v291 = vpack.c.b16 %v271, %v269
    %v292 = vpack.c.b16 %v272, %v270
    %v293 = vpack.c.b16 %v275, %v273
    %v294 = vpack.c.b16 %v276, %v274
    %v295 = vpack.c.b16 %v279, %v277
    %v296 = vpack.c.b16 %v280, %v278
    %313 = vmatpush.bf16.msra.mxu0 %v295
    %314 = vmatpush.bf16.msra.mxu0 %v293
    %315 = vmatpush.bf16.msra.mxu0 %v291
    %316 = vmatpush.bf16.msra.mxu0 %v289
    %317 = vmatpush.bf16.msra.mxu0 %v287
    %318 = vmatpush.bf16.msra.mxu0 %v285
    %319 = vmatpush.bf16.msra.mxu0 %v283
    %320 = vmatpush.bf16.msra.mxu0 %v281
    %321 = vmatmul.bf16.gmra.mxu0 %v206
    %v322 = vpop.f32.mrf.mxu0
    %v323 = vadd.f32 %v231, %v322
    %v324 = vpop.f32.mrf.mxu0
    %v325 = vadd.f32 %v231, %v324
    %326 = vmatmul.bf16.gmra.mxu0 %v207
    %v327 = vpop.f32.mrf.mxu0
    %v328 = vadd.f32 %v231, %v327
    %v329 = vpop.f32.mrf.mxu0
    %v330 = vadd.f32 %v231, %v329
    %331 = vdwg.mxu0
    %332 = vmatpush.bf16.msra.mxu0 %v296
    %333 = vmatpush.bf16.msra.mxu0 %v294
    %334 = vmatpush.bf16.msra.mxu0 %v292
    %335 = vmatpush.bf16.msra.mxu0 %v290
    %336 = vmatpush.bf16.msra.mxu0 %v288
    %337 = vmatpush.bf16.msra.mxu0 %v286
    %338 = vmatpush.bf16.msra.mxu0 %v284
    %339 = vmatpush.bf16.msra.mxu0 %v282
    %340 = vmatmul.bf16.gmra.mxu0 %v206
    %v341 = vpop.f32.mrf.mxu0
    %v342 = vadd.f32 %v232, %v341
    %v343 = vpop.f32.mrf.mxu0
    %v344 = vadd.f32 %v232, %v343
    %345 = vmatmul.bf16.gmra.mxu0 %v207
    %v346 = vpop.f32.mrf.mxu0
    %v347 = vadd.f32 %v232, %v346
    %v348 = vpop.f32.mrf.mxu0
    %v349 = vadd.f32 %v232, %v348
    %350 = vdwg.mxu0
    %v351 = vmul.f32 %v323, %v323
    %v352 = vmul.f32 %v342, %v342
    %v353 = vmul.f32 %v325, %v325
    %v354 = vmul.f32 %v344, %v344
    %v355 = vmul.f32 %v328, %v328
    %v356 = vmul.f32 %v347, %v347
    %v357 = vmul.f32 %v330, %v330
    %v358 = vmul.f32 %v349, %v349
    %v359 = vmul.f32 %v323, %v351
    %v360 = vmul.f32 %v342, %v352
    %v361 = vmul.f32 %v325, %v353
    %v362 = vmul.f32 %v344, %v354
    %v363 = vmul.f32 %v328, %v355
    %v364 = vmul.f32 %v347, %v356
    %v365 = vmul.f32 %v330, %v357
    %v366 = vmul.f32 %v349, %v358
    %v367 = vmul.f32 %v359, 0.044715
    %v368 = vmul.f32 %v360, 0.044715
    %v369 = vmul.f32 %v361, 0.044715
    %v370 = vmul.f32 %v362, 0.044715
    %v371 = vmul.f32 %v363, 0.044715
    %v372 = vmul.f32 %v364, 0.044715
    %v373 = vmul.f32 %v365, 0.044715
    %v374 = vmul.f32 %v366, 0.044715
    %v375 = vadd.f32 %v323, %v367
    %v376 = vadd.f32 %v342, %v368
    %v377 = vadd.f32 %v325, %v369
    %v378 = vadd.f32 %v344, %v370
    %v379 = vadd.f32 %v328, %v371
    %v380 = vadd.f32 %v347, %v372
    %v381 = vadd.f32 %v330, %v373
    %v382 = vadd.f32 %v349, %v374
    %v383 = vmul.f32 %v375, 0.7978846
    %v384 = vmul.f32 %v376, 0.7978846
    %v385 = vmul.f32 %v377, 0.7978846
    %v386 = vmul.f32 %v378, 0.7978846
    %v387 = vmul.f32 %v379, 0.7978846
    %v388 = vmul.f32 %v380, 0.7978846
    %v389 = vmul.f32 %v381, 0.7978846
    %v390 = vmul.f32 %v382, 0.7978846
    %v391 = vtanh.pop %v383
    %v392 = vtanh.pop %v384
    %v393 = vtanh.pop %v385
    %v394 = vtanh.pop %v386
    %v395 = vtanh.pop %v387
    %v396 = vtanh.pop %v388
    %v397 = vtanh.pop %v389
    %v398 = vtanh.pop %v390
    %v399 = vadd.f32 %v391, 1.0
    %v400 = vadd.f32 %v392, 1.0
    %v401 = vadd.f32 %v393, 1.0
    %v402 = vadd.f32 %v394, 1.0
    %v403 = vadd.f32 %v395, 1.0
    %v404 = vadd.f32 %v396, 1.0
    %v405 = vadd.f32 %v397, 1.0
    %v406 = vadd.f32 %v398, 1.0
    %v407 = vmul.f32 %v399, 0.5
    %v408 = vmul.f32 %v400, 0.5
    %v409 = vmul.f32 %v401, 0.5
    %v410 = vmul.f32 %v402, 0.5
    %v411 = vmul.f32 %v403, 0.5
    %v412 = vmul.f32 %v404, 0.5
    %v413 = vmul.f32 %v405, 0.5
    %v414 = vmul.f32 %v406, 0.5
    %v415 = vmul.f32 %v323, %v407
    %v416 = vmul.f32 %v342, %v408
    %v417 = vmul.f32 %v325, %v409
    %v418 = vmul.f32 %v344, %v410
    %v419 = vmul.f32 %v328, %v411
    %v420 = vmul.f32 %v347, %v412
    %v421 = vmul.f32 %v330, %v413
    %v422 = vmul.f32 %v349, %v414
    %v423 = vadd.f32 %v415, %v417
    %v424 = vrot.slane %v423, 4
    %v425 = vadd.f32 %v423, %v424
    %v426 = vrot.slane %v425, 2
    %v427 = vadd.f32 %v425, %v426
    %v428 = vrot.slane %v427, 1
    %v429 = vadd.f32 %v427, %v428
    %v430 = vadd.f32 %v416, %v418
    %v431 = vrot.slane %v430, 4
    %v432 = vadd.f32 %v430, %v431
    %v433 = vrot.slane %v432, 2
    %v434 = vadd.f32 %v432, %v433
    %v435 = vrot.slane %v434, 1
    %v436 = vadd.f32 %v434, %v435
    %v437 = vadd.f32 %v419, %v421
    %v438 = vrot.slane %v437, 4
    %v439 = vadd.f32 %v437, %v438
    %v440 = vrot.slane %v439, 2
    %v441 = vadd.f32 %v439, %v440
    %v442 = vrot.slane %v441, 1
    %v443 = vadd.f32 %v441, %v442
    %v444 = vadd.f32 %v420, %v422
    %v445 = vrot.slane %v444, 4
    %v446 = vadd.f32 %v444, %v445
    %v447 = vrot.slane %v446, 2
    %v448 = vadd.f32 %v446, %v447
    %v449 = vrot.slane %v448, 1
    %v450 = vadd.f32 %v448, %v449
    %v451 = vmul.f32 %v429, 0.0625
    %v452 = vmul.f32 %v436, 0.0625
    %v453 = vmul.f32 %v443, 0.0625
    %v454 = vmul.f32 %v450, 0.0625
    %v459 = vrot.slane %v452, 6
    %v460 = vrot.slane %v454, 6
    %vm461 = vcmask 1041408
    %v462 = vsel %vm461, %v451, %v459
    %v463 = vsel %vm461, %v453, %v460
    %vm464 = vcmask 1044484
    %v465 = vsel %vm464, %v462, %v462
    %vm466 = vcmask 1046534
    %v467 = vsel %vm466, %v462, %v465
    %v468 = vrot.slane %v463, 7
    %vm469 = vcmask 1041409
    %v470 = vsel %vm469, %v468, %v467
    %vm471 = vcmask 1043459
    %v472 = vsel %vm471, %v468, %v470
    %vm473 = vcmask 1045509
    %v474 = vsel %vm473, %v468, %v472
    %vm475 = vcmask 1047559
    %v476 = vsel %vm475, %v468, %v474
    %478 = vst [vmem:[#allocation8] sm:$0xf] %v476
    // Predicated region
    $region34: #{tpu_custom_call.1} parent=1 // pred_check
      _
    $region35: #{tpu_custom_call.1} parent=1 // pred_check_branch
      %480 = sbr.rel (0) target = $region37
    $region36: #{tpu_custom_call.1} parent=1 // pred_region
      %482 = vsyncadd [#allocation4], 0
      %s484 = sshll.u32 [#allocation8], 4
      %s485 = int_to_ptr.vmem [resolvable:$true] %s484
      %s486 = sshll.u32 %s5, 4
      %s487 = int_to_ptr.hbm [resolvable:$true] %s486
      %489 = dma.vmem_to_hbm [thread:$0]  %s485, 64, %s487, [#allocation4]
    $region37: #{tpu_custom_call.1} parent=1 // pred_fallthru
      _
    // Predicated region
    $region38: #{tpu_custom_call.1} parent=1 // pred_check
      _
    $region39: #{tpu_custom_call.1} parent=1 // pred_check_branch
      %491 = sbr.rel (0) target = $region41
    $region40: #{tpu_custom_call.1} parent=1 // pred_region
      %493 = dma.done [#allocation4], 64
    $region41: #{tpu_custom_call.1} parent=1 // pred_fallthru
      _
    %494 = vsyncpa [#allocation3], 1
    %495 = vsyncpa [#allocation6], 1
    %496 = vsyncpa [#allocation4], 1

</llo_original>
